<compile_context>
chip_gen: v7x
topology: tpu7x:2x2x1
jax: 0.10.0
libtpu: 0.0.40
codegen_flags: <defaults>
</compile_context>

<pallas_src>
import jax
import jax.numpy as jnp
from jax.experimental import pallas as pl
from jax.experimental.pallas import tpu as pltpu

BN_EPS = 1e-5
LANE = 128


def _round_up(n, m):
    return (n + m - 1) // m * m


# ----------------------------------------------------------------------------
# Kernel: (batch tile, K tile) grid.  K is the reduction axis (last, arbitrary).
# ----------------------------------------------------------------------------
def classifier_kernel(x_ref, wpf_ref, b1_ref, w2_ref, b2_ref, w3_ref, b3_ref,
                      out_ref, acc_ref):
    k = pl.program_id(1)

    @pl.when(k == 0)
    def _():
        acc_ref[...] = jnp.zeros_like(acc_ref)

    # In-kernel f32 -> bf16 cast of the x tile (VPU op, hidden under the
    # HBM-bound pipeline); GAP + projection + first Linear are pre-folded
    # into wpf, so this is the only deep-K matmul.  Accumulate in f32.
    acc_ref[...] += jnp.dot(x_ref[...].astype(jnp.bfloat16), wpf_ref[...],
                            preferred_element_type=jnp.float32)

    @pl.when(k == pl.num_programs(1) - 1)
    def _():
        # Head (BN eval + bias pre-folded): +b1 -> relu -> dot -> +b2 -> relu
        # -> dot -> +b3.  Dropout == identity at eval.  bf16 operands, f32 acc.
        h1 = jnp.maximum(acc_ref[...] + b1_ref[...], 0.0).astype(jnp.bfloat16)
        h2 = jnp.maximum(
            jnp.dot(h1, w2_ref[...], preferred_element_type=jnp.float32)
            + b2_ref[...], 0.0).astype(jnp.bfloat16)
        logits = jnp.dot(h2, w3_ref[...],
                         preferred_element_type=jnp.float32) + b3_ref[...]
        out_ref[...] = logits.astype(out_ref.dtype)


# ----------------------------------------------------------------------------
# One-time parameter prep (hoisted out of the per-call forward path).
# ----------------------------------------------------------------------------
def prepare_classifier_params(params, hw, *, block_k=16384):
    """Fold BN (eval) + bias into the linears, fold GAP (1/hw) and the head's
    first Linear into the projection, pad feature dims to 128 lanes, and cast
    weights to bf16.  Returns (operands, meta).  Call ONCE per parameter set."""
    wp, w1, b1, bn1, w2, b2, bn2, w3, b3 = params
    C, _ = wp.shape
    hidden = w1.shape[1]
    h2dim = w2.shape[1]
    ncls = w3.shape[1]

    def fold(w, b, bn):
        gamma, beta, mean, var = bn[0], bn[1], bn[2], bn[3]
        s = gamma / jnp.sqrt(var + BN_EPS)
        return w * s[None, :], (b[0] - mean) * s + beta

    w1f, b1f = fold(w1, b1, bn1)
    w2f, b2f = fold(w2, b2, bn2)
    w3f, b3f = w3, b3[0]

    # GAP + projection + first Linear folded into one [K, hidden] matrix:
    #   wp_fold[c*hw + s, :] = ((wp[c, :] / hw) @ w1f)
    # TODO(synk): only valid while no activation sits between the backbone
    # stand-in projection and the first Linear.
    wp_small = (wp / hw) @ w1f                       # [C, hidden], f32
    K = C * hw
    wp_fold = jnp.repeat(wp_small, hw, axis=0)       # [K, hidden]

    Hp = _round_up(hidden, LANE)
    H2p = _round_up(h2dim, LANE)
    Np = _round_up(ncls, LANE)

    # K tiling (tiles must be multiples of 128 lanes); zero-pad K (no effect).
    tk = min(_round_up(K, LANE), block_k)
    Kp = _round_up(K, tk)

    def pad2(a, rows, cols, dtype):
        z = jnp.zeros((rows, cols), jnp.float32)
        return z.at[:a.shape[0], :a.shape[1]].set(
            a.astype(jnp.float32)).astype(dtype)

    def pad1(v, cols):
        z = jnp.zeros((1, cols), jnp.float32)
        return z.at[0, :v.shape[0]].set(v.astype(jnp.float32))

    operands = (
        pad2(wp_fold, Kp, Hp, jnp.bfloat16),   # [Kp, Hp]   bf16 (big weight)
        pad1(b1f, Hp),                         # [1, Hp]    f32
        pad2(w2f, Hp, H2p, jnp.bfloat16),      # [Hp, H2p]  bf16
        pad1(b2f, H2p),                        # [1, H2p]   f32
        pad2(w3f, H2p, Np, jnp.bfloat16),      # [H2p, Np]  bf16
        pad1(b3f, Np),                         # [1, Np]    f32
    )
    meta = dict(K=K, Kp=Kp, tk=tk, Hp=Hp, H2p=H2p, Np=Np, ncls=ncls, hw=hw)
    return operands, meta


# ----------------------------------------------------------------------------
# Forward: reshape x, pick batch tiling, call the kernel.
# ----------------------------------------------------------------------------
def headlight_classifier_forward(x, operands, meta, *, block_b=512):
    """x: [B, C, H, W] float32 (NCHW). Returns logits [B, num_classes]."""
    B, C, H, W = x.shape
    hw = H * W
    K = C * hw
    assert K == meta["K"] and hw == meta["hw"], "prepared params/shape mismatch"
    Kp, tk = meta["Kp"], meta["tk"]
    Hp, H2p, Np, ncls = meta["Hp"], meta["H2p"], meta["Np"], meta["ncls"]

    # Batch tile: multiple of 8 (f32 sublane), aim for >= 2 grid steps so the
    # "parallel" batch axis can shard across v7x's two TensorCores, and clamp
    # so the double-buffered f32 x tile stays within ~32 MiB of VMEM.
    tb = min(block_b, max(8, _round_up(pl.cdiv(B, 2), 8)))
    x_tile_budget = 32 << 20
    tb_cap = max(8, (x_tile_budget // (2 * tk * 4)) // 8 * 8)
    tb = min(tb, tb_cap)
    Bp = _round_up(B, tb)

    # No dtype cast here: f32 flows straight into the kernel (cast in-kernel).
    x2d = x.reshape(B, K)
    if Bp != B or Kp != K:
        x2d = jnp.pad(x2d, ((0, Bp - B), (0, Kp - K)))

    nb, nk = Bp // tb, Kp // tk
    grid = (nb, nk)

    # Resident (grid-constant) operands: single-buffered (no VMEM waste).
    def _resident(shape):
        return pl.BlockSpec(shape, lambda i, k: (0, 0),
                            pipeline_mode=pl.Buffered(1))

    if nk == 1:
        wpf_spec = pl.BlockSpec((tk, Hp), lambda i, k: (0, 0),
                                pipeline_mode=pl.Buffered(1))
        wpf_bufs = 1
    else:
        wpf_spec = pl.BlockSpec((tk, Hp), lambda i, k: (k, 0))
        wpf_bufs = 2

    in_specs = [
        pl.BlockSpec((tb, tk), lambda i, k: (i, k)),   # x (f32, double-buf)
        wpf_spec,                                      # folded big weight
        _resident((1, Hp)),                            # b1
        _resident((Hp, H2p)),                          # w2
        _resident((1, H2p)),                           # b2
        _resident((H2p, Np)),                          # w3
        _resident((1, Np)),                            # b3
    ]
    out_spec = pl.BlockSpec((tb, Np), lambda i, k: (i, 0))

    # Explicit VMEM budget sized to the actual working set (+25% / +2 MiB).
    need = (2 * tb * tk * 4                     # x tile, double-buffered f32
            + wpf_bufs * tk * Hp * 2            # big weight, bf16
            + (Hp + H2p + Np) * 4               # biases, f32
            + (Hp * H2p + H2p * Np) * 2         # head weights, bf16
            + 2 * tb * Np * 4                   # output, double-buffered f32
            + tb * Hp * 4)                      # accumulator scratch
    vmem_limit = int(min(max(need * 1.25 + (2 << 20), 32 << 20), 100 << 20))

    out = pl.pallas_call(
        classifier_kernel,
        out_shape=jax.ShapeDtypeStruct((Bp, Np), jnp.float32),
        grid_spec=pltpu.PrefetchScalarGridSpec(
            num_scalar_prefetch=0,
            grid=grid,
            in_specs=in_specs,
            out_specs=out_spec,
            scratch_shapes=[pltpu.VMEM((tb, Hp), jnp.float32)],
        ),
        compiler_params=pltpu.CompilerParams(
            dimension_semantics=("parallel", "arbitrary"),
            vmem_limit_bytes=vmem_limit),
    )(x2d, *operands)

    return out[:B, :ncls]


# ----------------------------------------------------------------------------
# Synthetic parameters (module shapes / init scheme) + plain-JAX reference.
# ----------------------------------------------------------------------------
def init_params(key, in_channels, num_features=64, hidden=32, num_classes=4):
    """Deterministic synthetic weights matching the module's shapes.
    Linear: kaiming_normal(fan_out, relu) weights (pre-transposed to [in,out]),
    zero biases. BN: non-trivial synthetic gamma/beta/running stats so the
    eval-mode BN folding is actually exercised."""
    k0, k1, k2, k3, kb1, kb2 = jax.random.split(key, 6)

    # Backbone stand-in projection (deterministic, NOT a pretrained checkpoint).
    wp = jax.random.normal(k0, (in_channels, num_features), jnp.float32) \
        * (2.0 / num_features) ** 0.5

    def kaiming(k, fan_in, fan_out):
        return jax.random.normal(k, (fan_in, fan_out), jnp.float32) \
            * (2.0 / fan_out) ** 0.5

    def bn_pack(k, n):
        kg, kb, km, kv = jax.random.split(k, 4)
        gamma = 1.0 + 0.2 * jax.random.normal(kg, (n,), jnp.float32)
        beta = 0.1 * jax.random.normal(kb, (n,), jnp.float32)
        mean = 0.1 * jax.random.normal(km, (n,), jnp.float32)
        var = 0.5 + jax.random.uniform(kv, (n,), jnp.float32)
        return jnp.stack([gamma, beta, mean, var]).astype(jnp.float32)

    h2 = hidden // 2
    w1 = kaiming(k1, num_features, hidden)
    b1 = jnp.zeros((1, hidden), jnp.float32)
    bn1 = bn_pack(kb1, hidden)
    w2 = kaiming(k2, hidden, h2)
    b2 = jnp.zeros((1, h2), jnp.float32)
    bn2 = bn_pack(kb2, h2)
    w3 = kaiming(k3, h2, num_classes)
    b3 = jnp.zeros((1, num_classes), jnp.float32)
    return (wp, w1, b1, bn1, w2, b2, bn2, w3, b3)


def reference_forward(x, params):
    """Plain-JAX, f32, unfolded reference (GAP -> proj -> Linear/BN/ReLU x2 -> Linear)."""
    wp, w1, b1, bn1, w2, b2, bn2, w3, b3 = params
    B, C, H, W = x.shape
    pooled = jnp.mean(x.reshape(B, C, H * W), axis=-1)
    feats = pooled @ wp

    def bn_relu(h, bn):
        g, b, m, v = bn[0], bn[1], bn[2], bn[3]
        return jnp.maximum((h - m) / jnp.sqrt(v + BN_EPS) * g + b, 0.0)

    h1 = bn_relu(feats @ w1 + b1, bn1)
    hh = bn_relu(h1 @ w2 + b2, bn2)
    return hh @ w3 + b3


if __name__ == "__main__":
    B, C, H, W = 8, 4, 16, 16
    num_features, hidden, num_classes = 64, 32, 4

    key = jax.random.PRNGKey(0)
    kx, kp = jax.random.split(key)
    x = jax.random.normal(kx, (B, C, H, W), jnp.float32)
    params = init_params(kp, C, num_features, hidden, num_classes)

    # One-time parameter prep (folding / padding / bf16 casts) — NOT in the
    # per-call forward path.
    operands, meta = prepare_classifier_params(params, H * W)
    operands = tuple(jax.block_until_ready(o) for o in operands)

    out = headlight_classifier_forward(x, operands, meta)
    out = jax.block_until_ready(out)

    ref = reference_forward(x, params)
    assert out.shape == (B, num_classes)
    # bf16 x / weights / intermediate activations (f32 accumulation) -> loose
    # tolerance vs the f32 reference; re-validate if a real backbone K is used.
    assert jnp.allclose(out, ref, atol=2e-2, rtol=2e-2), "mismatch vs reference"

    print("KERNEL_OK")
</pallas_src>

<mosaic_0001>
module attributes {stable_mosaic.version = 11 : i64} {
  func.func @classifier_kernel(%arg0: i32, %arg1: i32, %arg2: memref<8x1024xf32, #tpu.memory_space<vmem>>, %arg3: memref<1024x128xbf16, #tpu.memory_space<vmem>>, %arg4: memref<1x128xf32, #tpu.memory_space<vmem>>, %arg5: memref<128x128xbf16, #tpu.memory_space<vmem>>, %arg6: memref<1x128xf32, #tpu.memory_space<vmem>>, %arg7: memref<128x128xbf16, #tpu.memory_space<vmem>>, %arg8: memref<1x128xf32, #tpu.memory_space<vmem>>, %arg9: memref<8x128xf32, #tpu.memory_space<vmem>>, %arg10: memref<8x128xf32, #tpu.memory_space<vmem>>) attributes {dimension_semantics = [#tpu.dimension_semantics<parallel>, #tpu.dimension_semantics<arbitrary>], iteration_bounds = array<i64: 1, 1>, scalar_prefetch = 0 : i64, scratch_operands = 1 : i64, tpu.core_type = #tpu.core_type<tc>, window_params = [{transform_indices = @transform_0, window_bounds = array<i64: 8, 1024>}, {pipeline_mode = #tpu.pipeline_mode<synchronous>, transform_indices = @transform_1, window_bounds = array<i64: 1024, 128>}, {pipeline_mode = #tpu.pipeline_mode<synchronous>, transform_indices = @transform_2, window_bounds = array<i64: 1, 128>}, {pipeline_mode = #tpu.pipeline_mode<synchronous>, transform_indices = @transform_3, window_bounds = array<i64: 128, 128>}, {pipeline_mode = #tpu.pipeline_mode<synchronous>, transform_indices = @transform_4, window_bounds = array<i64: 1, 128>}, {pipeline_mode = #tpu.pipeline_mode<synchronous>, transform_indices = @transform_5, window_bounds = array<i64: 128, 128>}, {pipeline_mode = #tpu.pipeline_mode<synchronous>, transform_indices = @transform_6, window_bounds = array<i64: 1, 128>}, {transform_indices = @transform_7, window_bounds = array<i64: 8, 128>}]} {
    %c0_i32 = arith.constant 0 : i32
    %0 = arith.cmpi eq, %arg1, %c0_i32 : i32
    %1 = arith.extui %0 : i1 to i32
    %c0_i32_0 = arith.constant 0 : i32
    %2 = arith.cmpi ne, %1, %c0_i32_0 : i32
    scf.if %2 {
      %cst_10 = arith.constant 0.000000e+00 : f32
      %13 = vector.broadcast %cst_10 : f32 to vector<8x128xf32>
      %c0_11 = arith.constant 0 : index
      %c0_12 = arith.constant 0 : index
      %14 = vector.load %arg10[%c0_11, %c0_12] : memref<8x128xf32, #tpu.memory_space<vmem>>, vector<8x128xf32>
      tpu.vector_store %arg10[%c0_11, %c0_12], %13 {strides = array<i32>} : memref<8x128xf32, #tpu.memory_space<vmem>>, vector<8x128xf32>,
    } else {
    }
    %c0 = arith.constant 0 : index
    %c0_1 = arith.constant 0 : index
    %3 = vector.load %arg10[%c0, %c0_1] : memref<8x128xf32, #tpu.memory_space<vmem>>, vector<8x128xf32>
    %c0_2 = arith.constant 0 : index
    %c0_3 = arith.constant 0 : index
    %4 = vector.load %arg2[%c0_2, %c0_3] : memref<8x1024xf32, #tpu.memory_space<vmem>>, vector<8x1024xf32>
    %5 = arith.truncf %4 : vector<8x1024xf32> to vector<8x1024xbf16>
    %c0_4 = arith.constant 0 : index
    %c0_5 = arith.constant 0 : index
    %6 = vector.load %arg3[%c0_4, %c0_5] : memref<1024x128xbf16, #tpu.memory_space<vmem>>, vector<1024x128xbf16>
    %cst = arith.constant dense<0.000000e+00> : vector<8x128xf32>
    %7 = tpu.matmul %5, %6, %cst {dimension_numbers = #tpu.dot_dimension_numbers<[1], [0], [0], [1], [0, 0, 1, 1], [], []>} : vector<8x1024xbf16>, vector<1024x128xbf16>, vector<8x128xf32> -> vector<8x128xf32>
    %8 = arith.addf %3, %7 : vector<8x128xf32>
    %c0_6 = arith.constant 0 : index
    %c0_7 = arith.constant 0 : index
    %9 = vector.load %arg10[%c0_6, %c0_7] : memref<8x128xf32, #tpu.memory_space<vmem>>, vector<8x128xf32>
    tpu.vector_store %arg10[%c0_6, %c0_7], %8 {strides = array<i32>} : memref<8x128xf32, #tpu.memory_space<vmem>>, vector<8x128xf32>,
    %c0_i32_8 = arith.constant 0 : i32
    %10 = arith.cmpi eq, %arg1, %c0_i32_8 : i32
    %11 = arith.extui %10 : i1 to i32
    %c0_i32_9 = arith.constant 0 : i32
    %12 = arith.cmpi ne, %11, %c0_i32_9 : i32
    scf.if %12 {
      %c0_10 = arith.constant 0 : index
      %c0_11 = arith.constant 0 : index
      %13 = vector.load %arg10[%c0_10, %c0_11] : memref<8x128xf32, #tpu.memory_space<vmem>>, vector<8x128xf32>
      %c0_12 = arith.constant 0 : index
      %c0_13 = arith.constant 0 : index
      %14 = vector.load %arg4[%c0_12, %c0_13] : memref<1x128xf32, #tpu.memory_space<vmem>>, vector<1x128xf32>
      %15 = vector.broadcast %14 : vector<1x128xf32> to vector<8x128xf32>
      %16 = arith.addf %13, %15 : vector<8x128xf32>
      %cst_14 = arith.constant 0.000000e+00 : f32
      %17 = vector.broadcast %cst_14 : f32 to vector<8x128xf32>
      %18 = arith.maximumf %16, %17 : vector<8x128xf32>
      %19 = arith.truncf %18 : vector<8x128xf32> to vector<8x128xbf16>
      %c0_15 = arith.constant 0 : index
      %c0_16 = arith.constant 0 : index
      %20 = vector.load %arg5[%c0_15, %c0_16] : memref<128x128xbf16, #tpu.memory_space<vmem>>, vector<128x128xbf16>
      %cst_17 = arith.constant dense<0.000000e+00> : vector<8x128xf32>
      %21 = tpu.matmul %19, %20, %cst_17 {dimension_numbers = #tpu.dot_dimension_numbers<[1], [0], [0], [1], [0, 0, 1, 1], [], []>} : vector<8x128xbf16>, vector<128x128xbf16>, vector<8x128xf32> -> vector<8x128xf32>
      %c0_18 = arith.constant 0 : index
      %c0_19 = arith.constant 0 : index
      %22 = vector.load %arg6[%c0_18, %c0_19] : memref<1x128xf32, #tpu.memory_space<vmem>>, vector<1x128xf32>
      %23 = vector.broadcast %22 : vector<1x128xf32> to vector<8x128xf32>
      %24 = arith.addf %21, %23 : vector<8x128xf32>
      %cst_20 = arith.constant 0.000000e+00 : f32
      %25 = vector.broadcast %cst_20 : f32 to vector<8x128xf32>
      %26 = arith.maximumf %24, %25 : vector<8x128xf32>
      %27 = arith.truncf %26 : vector<8x128xf32> to vector<8x128xbf16>
      %c0_21 = arith.constant 0 : index
      %c0_22 = arith.constant 0 : index
      %28 = vector.load %arg7[%c0_21, %c0_22] : memref<128x128xbf16, #tpu.memory_space<vmem>>, vector<128x128xbf16>
      %cst_23 = arith.constant dense<0.000000e+00> : vector<8x128xf32>
      %29 = tpu.matmul %27, %28, %cst_23 {dimension_numbers = #tpu.dot_dimension_numbers<[1], [0], [0], [1], [0, 0, 1, 1], [], []>} : vector<8x128xbf16>, vector<128x128xbf16>, vector<8x128xf32> -> vector<8x128xf32>
      %c0_24 = arith.constant 0 : index
      %c0_25 = arith.constant 0 : index
      %30 = vector.load %arg8[%c0_24, %c0_25] : memref<1x128xf32, #tpu.memory_space<vmem>>, vector<1x128xf32>
      %31 = vector.broadcast %30 : vector<1x128xf32> to vector<8x128xf32>
      %32 = arith.addf %29, %31 : vector<8x128xf32>
      %c0_26 = arith.constant 0 : index
      %c0_27 = arith.constant 0 : index
      %33 = vector.load %arg9[%c0_26, %c0_27] : memref<8x128xf32, #tpu.memory_space<vmem>>, vector<8x128xf32>
      tpu.vector_store %arg9[%c0_26, %c0_27], %32 {strides = array<i32>} : memref<8x128xf32, #tpu.memory_space<vmem>>, vector<8x128xf32>,
    } else {
    }
    return
  }
  func.func @transform_0(%arg0: i32, %arg1: i32) -> (i32, i32) {
    %c0_i32 = arith.constant 0 : i32
    return %arg0, %arg1 : i32, i32
  }
  func.func @transform_1(%arg0: i32, %arg1: i32) -> (i32, i32) {
    %c0_i32 = arith.constant 0 : i32
    %c0_i32_0 = arith.constant 0 : i32
    %c0_i32_1 = arith.constant 0 : i32
    return %c0_i32, %c0_i32_0 : i32, i32
  }
  func.func @transform_2(%arg0: i32, %arg1: i32) -> (i32, i32) {
    %c0_i32 = arith.constant 0 : i32
    %c0_i32_0 = arith.constant 0 : i32
    %c0_i32_1 = arith.constant 0 : i32
    return %c0_i32, %c0_i32_0 : i32, i32
  }
  func.func @transform_3(%arg0: i32, %arg1: i32) -> (i32, i32) {
    %c0_i32 = arith.constant 0 : i32
    %c0_i32_0 = arith.constant 0 : i32
    %c0_i32_1 = arith.constant 0 : i32
    return %c0_i32, %c0_i32_0 : i32, i32
  }
  func.func @transform_4(%arg0: i32, %arg1: i32) -> (i32, i32) {
    %c0_i32 = arith.constant 0 : i32
    %c0_i32_0 = arith.constant 0 : i32
    %c0_i32_1 = arith.constant 0 : i32
    return %c0_i32, %c0_i32_0 : i32, i32
  }
  func.func @transform_5(%arg0: i32, %arg1: i32) -> (i32, i32) {
    %c0_i32 = arith.constant 0 : i32
    %c0_i32_0 = arith.constant 0 : i32
    %c0_i32_1 = arith.constant 0 : i32
    return %c0_i32, %c0_i32_0 : i32, i32
  }
  func.func @transform_6(%arg0: i32, %arg1: i32) -> (i32, i32) {
    %c0_i32 = arith.constant 0 : i32
    %c0_i32_0 = arith.constant 0 : i32
    %c0_i32_1 = arith.constant 0 : i32
    return %c0_i32, %c0_i32_0 : i32, i32
  }
  func.func @transform_7(%arg0: i32, %arg1: i32) -> (i32, i32) {
    %c0_i32 = arith.constant 0 : i32
    %c0_i32_0 = arith.constant 0 : i32
    return %arg0, %c0_i32 : i32, i32
  }
}

</mosaic_0001>

<llo_original>
// kernel: tpu_custom_call.1
$region0: #{tpu_custom_call.1}
  #allocation0 [shape = 'u32[]', space=smem, size = 0x4, offset = 0x4, fixed_abs, tag = 'smem constant byte address 0x4 - core index']
  #allocation1 [shape = 'u32[144,128]{1,0:T(1,128)}', space=vmem, size = 0x12000, scoped, tag = 'internal scratch']
  #allocation2 [shape = 'f32[8,128]{1,0:T(8,128)}', space=vmem, size = 0x1000, scoped, tag = 'scratch operand']
  %s0 = inlined_call_operand.hbm [shape: f32[8,1024], index: 0, kind: input, shape index: {}]
  %s1 = inlined_call_operand.hbm [shape: bf16[1024,128], index: 1, kind: input, shape index: {}]
  %s2 = inlined_call_operand.vmem [shape: f32[1,128], index: 2, kind: input, shape index: {}]
  %s3 = inlined_call_operand.hbm [shape: bf16[128,128], index: 3, kind: input, shape index: {}]
  %s4 = inlined_call_operand.vmem [shape: f32[1,128], index: 4, kind: input, shape index: {}]
  %s5 = inlined_call_operand.hbm [shape: bf16[128,128], index: 5, kind: input, shape index: {}]
  %s6 = inlined_call_operand.vmem [shape: f32[1,128], index: 6, kind: input, shape index: {}]
  %s7 = inlined_call_operand.hbm [shape: f32[8,128], index: 7, kind: output, shape index: {}]
  %s8 = sld [smem:[#allocation0]]
  $region62: #{tpu_custom_call.1} parent=0
    _
  %s10 = ssub.s32 1, %s8
  %s11 = scalar_select 0, %s10, %s8
  $region1: #{tpu_custom_call.1} parent=0
    #allocation3 [shape = 'u8[32768]{0}', space=vmem, size = 0x8000, scoped, tag = 'input window, operand 0, single buffered']
    #allocation4 [shape = 's32[1]{0}', space=sflag, size = 0x4, scoped, tag = 'scoped memory for tpu_custom_call.1']
    #allocation5 [shape = 's32[1]{0}', space=sflag, size = 0x4, scoped, tag = 'scoped memory for tpu_custom_call.1']
    #allocation6 [shape = 'u8[262144]{0}', space=vmem, size = 0x40000, scoped, tag = 'input window, operand 1, single buffered']
    #allocation7 [shape = 's32[1]{0}', space=sflag, size = 0x4, scoped, tag = 'scoped memory for tpu_custom_call.1']
    #allocation8 [shape = 'u8[32768]{0}', space=vmem, size = 0x8000, scoped, tag = 'input window, operand 3, single buffered']
    #allocation9 [shape = 'u8[32768]{0}', space=vmem, size = 0x8000, scoped, tag = 'input window, operand 5, single buffered']
    #allocation10 [shape = 's32[1]{0}', space=sflag, size = 0x4, scoped, tag = 'scoped memory for tpu_custom_call.1']
    #allocation11 [shape = 'u8[4096]{0}', space=vmem, size = 0x1000, scoped, tag = 'output window, operand 0, single buffered']
    %12 = vsyncpa [#allocation4], 0
    %13 = vsyncpa [#allocation7], 0
    %14 = vsyncpa [#allocation10], 0
    %15 = vsyncpa [#allocation5], 0
    // Predicated region
    $region2: #{tpu_custom_call.1} parent=1 // pred_check
      _
    $region3: #{tpu_custom_call.1} parent=1 // pred_check_branch
      %17 = sbr.rel (0) target = $region5
    $region4: #{tpu_custom_call.1} parent=1 // pred_region
      %s19 = ssub.s32 1024, 1024
      %20 = vsyncadd [#allocation4], %s19
      %s22 = sshll.u32 [#allocation3], 4
      %s23 = int_to_ptr.vmem [resolvable:$true] %s22
      %25 = dma.hbm_to_vmem [thread:$0]  %s0, 1024, %s23, [#allocation4]
    $region5: #{tpu_custom_call.1} parent=1 // pred_fallthru
      _
    // Predicated region
    $region6: #{tpu_custom_call.1} parent=1 // pred_check
      _
    $region7: #{tpu_custom_call.1} parent=1 // pred_check_branch
      %27 = sbr.rel (0) target = $region9
    $region8: #{tpu_custom_call.1} parent=1 // pred_region
      %s29 = ssub.s32 8192, 8192
      %30 = vsyncadd [#allocation7], %s29
      %s31 = sshll.u32 [#allocation6], 4
      %s32 = int_to_ptr.vmem [resolvable:$true] %s31
      %37 = dma.hbm_to_vmem [thread:$0]  %s1, 8192, %s32, [#allocation7], 64, 64, 4
    $region9: #{tpu_custom_call.1} parent=1 // pred_fallthru
      _
    // Predicated region
    $region10: #{tpu_custom_call.1} parent=1 // pred_check
      _
    $region11: #{tpu_custom_call.1} parent=1 // pred_check_branch
      %39 = sbr.rel (0) target = $region13
    $region12: #{tpu_custom_call.1} parent=1 // pred_region
      _
    $region13: #{tpu_custom_call.1} parent=1 // pred_fallthru
      _
    // Predicated region
    $region14: #{tpu_custom_call.1} parent=1 // pred_check
      _
    $region15: #{tpu_custom_call.1} parent=1 // pred_check_branch
      %41 = sbr.rel (0) target = $region17
    $region16: #{tpu_custom_call.1} parent=1 // pred_region
      %s43 = ssub.s32 1024, 1024
      %44 = vsyncadd [#allocation7], %s43
      %s45 = sshll.u32 [#allocation8], 4
      %s46 = int_to_ptr.vmem [resolvable:$true] %s45
      %51 = dma.hbm_to_vmem [thread:$0]  %s3, 1024, %s46, [#allocation7], 64, 64, 4
    $region17: #{tpu_custom_call.1} parent=1 // pred_fallthru
      _
    // Predicated region
    $region18: #{tpu_custom_call.1} parent=1 // pred_check
      _
    $region19: #{tpu_custom_call.1} parent=1 // pred_check_branch
      %53 = sbr.rel (0) target = $region21
    $region20: #{tpu_custom_call.1} parent=1 // pred_region
      _
    $region21: #{tpu_custom_call.1} parent=1 // pred_fallthru
      _
    // Predicated region
    $region22: #{tpu_custom_call.1} parent=1 // pred_check
      _
    $region23: #{tpu_custom_call.1} parent=1 // pred_check_branch
      %55 = sbr.rel (0) target = $region25
    $region24: #{tpu_custom_call.1} parent=1 // pred_region
      %s57 = ssub.s32 1024, 1024
      %58 = vsyncadd [#allocation10], %s57
      %s59 = sshll.u32 [#allocation9], 4
      %s60 = int_to_ptr.vmem [resolvable:$true] %s59
      %65 = dma.hbm_to_vmem [thread:$0]  %s5, 1024, %s60, [#allocation10], 64, 64, 4
    $region25: #{tpu_custom_call.1} parent=1 // pred_fallthru
      _
    // Predicated region
    $region26: #{tpu_custom_call.1} parent=1 // pred_check
      _
    $region27: #{tpu_custom_call.1} parent=1 // pred_check_branch
      %67 = sbr.rel (0) target = $region29
    $region28: #{tpu_custom_call.1} parent=1 // pred_region
      _
    $region29: #{tpu_custom_call.1} parent=1 // pred_fallthru
      _
    // Predicated region
    $region30: #{tpu_custom_call.1} parent=1 // pred_check
      _
    $region31: #{tpu_custom_call.1} parent=1 // pred_check_branch
      %69 = sbr.rel (0) target = $region33
    $region32: #{tpu_custom_call.1} parent=1 // pred_region
      %70 = dma.done [#allocation4], 1024
    $region33: #{tpu_custom_call.1} parent=1 // pred_fallthru
      _
    // Predicated region
    $region34: #{tpu_custom_call.1} parent=1 // pred_check
      _
    $region35: #{tpu_custom_call.1} parent=1 // pred_check_branch
      %72 = sbr.rel (0) target = $region37
    $region36: #{tpu_custom_call.1} parent=1 // pred_region
      %73 = dma.done [#allocation7], 8192
    $region37: #{tpu_custom_call.1} parent=1 // pred_fallthru
      _
    // Predicated region
    $region38: #{tpu_custom_call.1} parent=1 // pred_check
      _
    $region39: #{tpu_custom_call.1} parent=1 // pred_check_branch
      %75 = sbr.rel (0) target = $region41
    $region40: #{tpu_custom_call.1} parent=1 // pred_region
      %76 = dma.done [#allocation7], 1024
    $region41: #{tpu_custom_call.1} parent=1 // pred_fallthru
      _
    // Predicated region
    $region42: #{tpu_custom_call.1} parent=1 // pred_check
      _
    $region43: #{tpu_custom_call.1} parent=1 // pred_check_branch
      %78 = sbr.rel (0) target = $region45
    $region44: #{tpu_custom_call.1} parent=1 // pred_region
      %79 = dma.done [#allocation10], 1024
    $region45: #{tpu_custom_call.1} parent=1 // pred_fallthru
      _
    %p81 = scmp.eq.s32.totalorder 0, 0
    // Predicated region
    $region46: #{tpu_custom_call.1} parent=1 // pred_check
      %p82 = pneg %p81
    $region47: #{tpu_custom_call.1} parent=1 // pred_check_branch
      %84 = sbr.rel (%p82) target = $region49
    $region48: #{tpu_custom_call.1} parent=1 // pred_region
      %85 = vst [vmem:[#allocation2] sm:$0xff] 0.0
    $region49: #{tpu_custom_call.1} parent=1 // pred_fallthru
      _
    %v86 = vld [vmem:[#allocation2] sm:$0xff]
    %v87 = vld [vmem:[#allocation3] sm:$0xff]
    %v88 = vld [vmem:[#allocation3 + $0x8] sm:$0xff]
    %v89 = vld [vmem:[#allocation3 + $0x10] sm:$0xff]
    %v90 = vld [vmem:[#allocation3 + $0x18] sm:$0xff]
    %v91 = vld [vmem:[#allocation3 + $0x20] sm:$0xff]
    %v92 = vld [vmem:[#allocation3 + $0x28] sm:$0xff]
    %v93 = vld [vmem:[#allocation3 + $0x30] sm:$0xff]
    %v94 = vld [vmem:[#allocation3 + $0x38] sm:$0xff]
    %v95 = vpack.c.bf16 %v87, %v87
    %v96 = vpack.c.bf16 %v88, %v88
    %v97 = vpack.c.bf16 %v89, %v89
    %v98 = vpack.c.bf16 %v90, %v90
    %v99 = vpack.c.bf16 %v91, %v91
    %v100 = vpack.c.bf16 %v92, %v92
    %v101 = vpack.c.bf16 %v93, %v93
    %v102 = vpack.c.bf16 %v94, %v94
    %v103 = vld [vmem:[#allocation6] sm:$0xf]
    %v104 = vld [vmem:[#allocation6 + $0x4] sm:$0xf]
    %v105 = vld [vmem:[#allocation6 + $0x8] sm:$0xf]
    %v106 = vld [vmem:[#allocation6 + $0xc] sm:$0xf]
    %v107 = vld [vmem:[#allocation6 + $0x10] sm:$0xf]
    %v108 = vld [vmem:[#allocation6 + $0x14] sm:$0xf]
    %v109 = vld [vmem:[#allocation6 + $0x18] sm:$0xf]
    %v110 = vld [vmem:[#allocation6 + $0x1c] sm:$0xf]
    %v111 = vld [vmem:[#allocation6 + $0x20] sm:$0xf]
    %v112 = vld [vmem:[#allocation6 + $0x24] sm:$0xf]
    %v113 = vld [vmem:[#allocation6 + $0x28] sm:$0xf]
    %v114 = vld [vmem:[#allocation6 + $0x2c] sm:$0xf]
    %v115 = vld [vmem:[#allocation6 + $0x30] sm:$0xf]
    %v116 = vld [vmem:[#allocation6 + $0x34] sm:$0xf]
    %v117 = vld [vmem:[#allocation6 + $0x38] sm:$0xf]
    %v118 = vld [vmem:[#allocation6 + $0x3c] sm:$0xf]
    %v119 = vld [vmem:[#allocation6 + $0x40] sm:$0xf]
    %v120 = vld [vmem:[#allocation6 + $0x44] sm:$0xf]
    %v121 = vld [vmem:[#allocation6 + $0x48] sm:$0xf]
    %v122 = vld [vmem:[#allocation6 + $0x4c] sm:$0xf]
    %v123 = vld [vmem:[#allocation6 + $0x50] sm:$0xf]
    %v124 = vld [vmem:[#allocation6 + $0x54] sm:$0xf]
    %v125 = vld [vmem:[#allocation6 + $0x58] sm:$0xf]
    %v126 = vld [vmem:[#allocation6 + $0x5c] sm:$0xf]
    %v127 = vld [vmem:[#allocation6 + $0x60] sm:$0xf]
    %v128 = vld [vmem:[#allocation6 + $0x64] sm:$0xf]
    %v129 = vld [vmem:[#allocation6 + $0x68] sm:$0xf]
    %v130 = vld [vmem:[#allocation6 + $0x6c] sm:$0xf]
    %v131 = vld [vmem:[#allocation6 + $0x70] sm:$0xf]
    %v132 = vld [vmem:[#allocation6 + $0x74] sm:$0xf]
    %v133 = vld [vmem:[#allocation6 + $0x78] sm:$0xf]
    %v134 = vld [vmem:[#allocation6 + $0x7c] sm:$0xf]
    %v135 = vld [vmem:[#allocation6 + $0x80] sm:$0xf]
    %v136 = vld [vmem:[#allocation6 + $0x84] sm:$0xf]
    %v137 = vld [vmem:[#allocation6 + $0x88] sm:$0xf]
    %v138 = vld [vmem:[#allocation6 + $0x8c] sm:$0xf]
    %v139 = vld [vmem:[#allocation6 + $0x90] sm:$0xf]
    %v140 = vld [vmem:[#allocation6 + $0x94] sm:$0xf]
    %v141 = vld [vmem:[#allocation6 + $0x98] sm:$0xf]
    %v142 = vld [vmem:[#allocation6 + $0x9c] sm:$0xf]
    %v143 = vld [vmem:[#allocation6 + $0xa0] sm:$0xf]
    %v144 = vld [vmem:[#allocation6 + $0xa4] sm:$0xf]
    %v145 = vld [vmem:[#allocation6 + $0xa8] sm:$0xf]
    %v146 = vld [vmem:[#allocation6 + $0xac] sm:$0xf]
    %v147 = vld [vmem:[#allocation6 + $0xb0] sm:$0xf]
    %v148 = vld [vmem:[#allocation6 + $0xb4] sm:$0xf]
    %v149 = vld [vmem:[#allocation6 + $0xb8] sm:$0xf]
    %v150 = vld [vmem:[#allocation6 + $0xbc] sm:$0xf]
    %v151 = vld [vmem:[#allocation6 + $0xc0] sm:$0xf]
    %v152 = vld [vmem:[#allocation6 + $0xc4] sm:$0xf]
    %v153 = vld [vmem:[#allocation6 + $0xc8] sm:$0xf]
    %v154 = vld [vmem:[#allocation6 + $0xcc] sm:$0xf]
    %v155 = vld [vmem:[#allocation6 + $0xd0] sm:$0xf]
    %v156 = vld [vmem:[#allocation6 + $0xd4] sm:$0xf]
    %v157 = vld [vmem:[#allocation6 + $0xd8] sm:$0xf]
    %v158 = vld [vmem:[#allocation6 + $0xdc] sm:$0xf]
    %v159 = vld [vmem:[#allocation6 + $0xe0] sm:$0xf]
    %v160 = vld [vmem:[#allocation6 + $0xe4] sm:$0xf]
    %v161 = vld [vmem:[#allocation6 + $0xe8] sm:$0xf]
    %v162 = vld [vmem:[#allocation6 + $0xec] sm:$0xf]
    %v163 = vld [vmem:[#allocation6 + $0xf0] sm:$0xf]
    %v164 = vld [vmem:[#allocation6 + $0xf4] sm:$0xf]
    %v165 = vld [vmem:[#allocation6 + $0xf8] sm:$0xf]
    %v166 = vld [vmem:[#allocation6 + $0xfc] sm:$0xf]
    %v167 = vld [vmem:[#allocation6 + $0x100] sm:$0xf]
    %v168 = vld [vmem:[#allocation6 + $0x104] sm:$0xf]
    %v169 = vld [vmem:[#allocation6 + $0x108] sm:$0xf]
    %v170 = vld [vmem:[#allocation6 + $0x10c] sm:$0xf]
    %v171 = vld [vmem:[#allocation6 + $0x110] sm:$0xf]
    %v172 = vld [vmem:[#allocation6 + $0x114] sm:$0xf]
    %v173 = vld [vmem:[#allocation6 + $0x118] sm:$0xf]
    %v174 = vld [vmem:[#allocation6 + $0x11c] sm:$0xf]
    %v175 = vld [vmem:[#allocation6 + $0x120] sm:$0xf]
    %v176 = vld [vmem:[#allocation6 + $0x124] sm:$0xf]
    %v177 = vld [vmem:[#allocation6 + $0x128] sm:$0xf]
    %v178 = vld [vmem:[#allocation6 + $0x12c] sm:$0xf]
    %v179 = vld [vmem:[#allocation6 + $0x130] sm:$0xf]
    %v180 = vld [vmem:[#allocation6 + $0x134] sm:$0xf]
    %v181 = vld [vmem:[#allocation6 + $0x138] sm:$0xf]
    %v182 = vld [vmem:[#allocation6 + $0x13c] sm:$0xf]
    %v183 = vld [vmem:[#allocation6 + $0x140] sm:$0xf]
    %v184 = vld [vmem:[#allocation6 + $0x144] sm:$0xf]
    %v185 = vld [vmem:[#allocation6 + $0x148] sm:$0xf]
    %v186 = vld [vmem:[#allocation6 + $0x14c] sm:$0xf]
    %v187 = vld [vmem:[#allocation6 + $0x150] sm:$0xf]
    %v188 = vld [vmem:[#allocation6 + $0x154] sm:$0xf]
    %v189 = vld [vmem:[#allocation6 + $0x158] sm:$0xf]
    %v190 = vld [vmem:[#allocation6 + $0x15c] sm:$0xf]
    %v191 = vld [vmem:[#allocation6 + $0x160] sm:$0xf]
    %v192 = vld [vmem:[#allocation6 + $0x164] sm:$0xf]
    %v193 = vld [vmem:[#allocation6 + $0x168] sm:$0xf]
    %v194 = vld [vmem:[#allocation6 + $0x16c] sm:$0xf]
    %v195 = vld [vmem:[#allocation6 + $0x170] sm:$0xf]
    %v196 = vld [vmem:[#allocation6 + $0x174] sm:$0xf]
    %v197 = vld [vmem:[#allocation6 + $0x178] sm:$0xf]
    %v198 = vld [vmem:[#allocation6 + $0x17c] sm:$0xf]
    %v199 = vld [vmem:[#allocation6 + $0x180] sm:$0xf]
    %v200 = vld [vmem:[#allocation6 + $0x184] sm:$0xf]
    %v201 = vld [vmem:[#allocation6 + $0x188] sm:$0xf]
    %v202 = vld [vmem:[#allocation6 + $0x18c] sm:$0xf]
    %v203 = vld [vmem:[#allocation6 + $0x190] sm:$0xf]
    %v204 = vld [vmem:[#allocation6 + $0x194] sm:$0xf]
    %v205 = vld [vmem:[#allocation6 + $0x198] sm:$0xf]
    %v206 = vld [vmem:[#allocation6 + $0x19c] sm:$0xf]
    %v207 = vld [vmem:[#allocation6 + $0x1a0] sm:$0xf]
    %v208 = vld [vmem:[#allocation6 + $0x1a4] sm:$0xf]
    %v209 = vld [vmem:[#allocation6 + $0x1a8] sm:$0xf]
    %v210 = vld [vmem:[#allocation6 + $0x1ac] sm:$0xf]
    %v211 = vld [vmem:[#allocation6 + $0x1b0] sm:$0xf]
    %v212 = vld [vmem:[#allocation6 + $0x1b4] sm:$0xf]
    %v213 = vld [vmem:[#allocation6 + $0x1b8] sm:$0xf]
    %v214 = vld [vmem:[#allocation6 + $0x1bc] sm:$0xf]
    %v215 = vld [vmem:[#allocation6 + $0x1c0] sm:$0xf]
    %v216 = vld [vmem:[#allocation6 + $0x1c4] sm:$0xf]
    %v217 = vld [vmem:[#allocation6 + $0x1c8] sm:$0xf]
    %v218 = vld [vmem:[#allocation6 + $0x1cc] sm:$0xf]
    %v219 = vld [vmem:[#allocation6 + $0x1d0] sm:$0xf]
    %v220 = vld [vmem:[#allocation6 + $0x1d4] sm:$0xf]
    %v221 = vld [vmem:[#allocation6 + $0x1d8] sm:$0xf]
    %v222 = vld [vmem:[#allocation6 + $0x1dc] sm:$0xf]
    %v223 = vld [vmem:[#allocation6 + $0x1e0] sm:$0xf]
    %v224 = vld [vmem:[#allocation6 + $0x1e4] sm:$0xf]
    %v225 = vld [vmem:[#allocation6 + $0x1e8] sm:$0xf]
    %v226 = vld [vmem:[#allocation6 + $0x1ec] sm:$0xf]
    %v227 = vld [vmem:[#allocation6 + $0x1f0] sm:$0xf]
    %v228 = vld [vmem:[#allocation6 + $0x1f4] sm:$0xf]
    %v229 = vld [vmem:[#allocation6 + $0x1f8] sm:$0xf]
    %v230 = vld [vmem:[#allocation6 + $0x1fc] sm:$0xf]
    %v359 = vunpack.c.l.b16 %v103
    %v360 = vunpack.c.l.b16 %v104
    %v361 = vunpack.c.l.b16 %v105
    %v362 = vunpack.c.l.b16 %v106
    %v363 = vunpack.c.l.b16 %v107
    %v364 = vunpack.c.l.b16 %v108
    %v365 = vunpack.c.l.b16 %v109
    %v366 = vunpack.c.l.b16 %v110
    %v367 = vunpack.c.l.b16 %v111
    %v368 = vunpack.c.l.b16 %v112
    %v369 = vunpack.c.l.b16 %v113
    %v370 = vunpack.c.l.b16 %v114
    %v371 = vunpack.c.l.b16 %v115
    %v372 = vunpack.c.l.b16 %v116
    %v373 = vunpack.c.l.b16 %v117
    %v374 = vunpack.c.l.b16 %v118
    %v375 = vunpack.c.l.b16 %v119
    %v376 = vunpack.c.l.b16 %v120
    %v377 = vunpack.c.l.b16 %v121
    %v378 = vunpack.c.l.b16 %v122
    %v379 = vunpack.c.l.b16 %v123
    %v380 = vunpack.c.l.b16 %v124
    %v381 = vunpack.c.l.b16 %v125
    %v382 = vunpack.c.l.b16 %v126
    %v383 = vunpack.c.l.b16 %v127
    %v384 = vunpack.c.l.b16 %v128
    %v385 = vunpack.c.l.b16 %v129
    %v386 = vunpack.c.l.b16 %v130
    %v387 = vunpack.c.l.b16 %v131
    %v388 = vunpack.c.l.b16 %v132
    %v389 = vunpack.c.l.b16 %v133
    %v390 = vunpack.c.l.b16 %v134
    %v391 = vunpack.c.l.b16 %v135
    %v392 = vunpack.c.l.b16 %v136
    %v393 = vunpack.c.l.b16 %v137
    %v394 = vunpack.c.l.b16 %v138
    %v395 = vunpack.c.l.b16 %v139
    %v396 = vunpack.c.l.b16 %v140
    %v397 = vunpack.c.l.b16 %v141
    %v398 = vunpack.c.l.b16 %v142
    %v399 = vunpack.c.l.b16 %v143
    %v400 = vunpack.c.l.b16 %v144
    %v401 = vunpack.c.l.b16 %v145
    %v402 = vunpack.c.l.b16 %v146
    %v403 = vunpack.c.l.b16 %v147
    %v404 = vunpack.c.l.b16 %v148
    %v405 = vunpack.c.l.b16 %v149
    %v406 = vunpack.c.l.b16 %v150
    %v407 = vunpack.c.l.b16 %v151
    %v408 = vunpack.c.l.b16 %v152
    %v409 = vunpack.c.l.b16 %v153
    %v410 = vunpack.c.l.b16 %v154
    %v411 = vunpack.c.l.b16 %v155
    %v412 = vunpack.c.l.b16 %v156
    %v413 = vunpack.c.l.b16 %v157
    %v414 = vunpack.c.l.b16 %v158
    %v415 = vunpack.c.l.b16 %v159
    %v416 = vunpack.c.l.b16 %v160
    %v417 = vunpack.c.l.b16 %v161
    %v418 = vunpack.c.l.b16 %v162
    %v419 = vunpack.c.l.b16 %v163
    %v420 = vunpack.c.l.b16 %v164
    %v421 = vunpack.c.l.b16 %v165
    %v422 = vunpack.c.l.b16 %v166
    %v423 = vunpack.c.l.b16 %v167
    %v424 = vunpack.c.l.b16 %v168
    %v425 = vunpack.c.l.b16 %v169
    %v426 = vunpack.c.l.b16 %v170
    %v427 = vunpack.c.l.b16 %v171
    %v428 = vunpack.c.l.b16 %v172
    %v429 = vunpack.c.l.b16 %v173
    %v430 = vunpack.c.l.b16 %v174
    %v431 = vunpack.c.l.b16 %v175
    %v432 = vunpack.c.l.b16 %v176
    %v433 = vunpack.c.l.b16 %v177
    %v434 = vunpack.c.l.b16 %v178
    %v435 = vunpack.c.l.b16 %v179
    %v436 = vunpack.c.l.b16 %v180
    %v437 = vunpack.c.l.b16 %v181
    %v438 = vunpack.c.l.b16 %v182
    %v439 = vunpack.c.l.b16 %v183
    %v440 = vunpack.c.l.b16 %v184
    %v441 = vunpack.c.l.b16 %v185
    %v442 = vunpack.c.l.b16 %v186
    %v443 = vunpack.c.l.b16 %v187
    %v444 = vunpack.c.l.b16 %v188
    %v445 = vunpack.c.l.b16 %v189
    %v446 = vunpack.c.l.b16 %v190
    %v447 = vunpack.c.l.b16 %v191
    %v448 = vunpack.c.l.b16 %v192
    %v449 = vunpack.c.l.b16 %v193
    %v450 = vunpack.c.l.b16 %v194
    %v451 = vunpack.c.l.b16 %v195
    %v452 = vunpack.c.l.b16 %v196
    %v453 = vunpack.c.l.b16 %v197
    %v454 = vunpack.c.l.b16 %v198
    %v455 = vunpack.c.l.b16 %v199
    %v456 = vunpack.c.l.b16 %v200
    %v457 = vunpack.c.l.b16 %v201
    %v458 = vunpack.c.l.b16 %v202
    %v459 = vunpack.c.l.b16 %v203
    %v460 = vunpack.c.l.b16 %v204
    %v461 = vunpack.c.l.b16 %v205
    %v462 = vunpack.c.l.b16 %v206
    %v463 = vunpack.c.l.b16 %v207
    %v464 = vunpack.c.l.b16 %v208
    %v465 = vunpack.c.l.b16 %v209
    %v466 = vunpack.c.l.b16 %v210
    %v467 = vunpack.c.l.b16 %v211
    %v468 = vunpack.c.l.b16 %v212
    %v469 = vunpack.c.l.b16 %v213
    %v470 = vunpack.c.l.b16 %v214
    %v471 = vunpack.c.l.b16 %v215
    %v472 = vunpack.c.l.b16 %v216
    %v473 = vunpack.c.l.b16 %v217
    %v474 = vunpack.c.l.b16 %v218
    %v475 = vunpack.c.l.b16 %v219
    %v476 = vunpack.c.l.b16 %v220
    %v477 = vunpack.c.l.b16 %v221
    %v478 = vunpack.c.l.b16 %v222
    %v479 = vunpack.c.l.b16 %v223
    %v480 = vunpack.c.l.b16 %v224
    %v481 = vunpack.c.l.b16 %v225
    %v482 = vunpack.c.l.b16 %v226
    %v483 = vunpack.c.l.b16 %v227
    %v484 = vunpack.c.l.b16 %v228
    %v485 = vunpack.c.l.b16 %v229
    %v486 = vunpack.c.l.b16 %v230
    %v487 = vpack.c.b16 %v360, %v359
    %v488 = vpack.c.b16 %v362, %v361
    %v489 = vpack.c.b16 %v364, %v363
    %v490 = vpack.c.b16 %v366, %v365
    %v491 = vpack.c.b16 %v368, %v367
    %v492 = vpack.c.b16 %v370, %v369
    %v493 = vpack.c.b16 %v372, %v371
    %v494 = vpack.c.b16 %v374, %v373
    %v495 = vpack.c.b16 %v376, %v375
    %v496 = vpack.c.b16 %v378, %v377
    %v497 = vpack.c.b16 %v380, %v379
    %v498 = vpack.c.b16 %v382, %v381
    %v499 = vpack.c.b16 %v384, %v383
    %v500 = vpack.c.b16 %v386, %v385
    %v501 = vpack.c.b16 %v388, %v387
    %v502 = vpack.c.b16 %v390, %v389
    %v503 = vpack.c.b16 %v392, %v391
    %v504 = vpack.c.b16 %v394, %v393
    %v505 = vpack.c.b16 %v396, %v395
    %v506 = vpack.c.b16 %v398, %v397
    %v507 = vpack.c.b16 %v400, %v399
    %v508 = vpack.c.b16 %v402, %v401
    %v509 = vpack.c.b16 %v404, %v403
    %v510 = vpack.c.b16 %v406, %v405
    %v511 = vpack.c.b16 %v408, %v407
    %v512 = vpack.c.b16 %v410, %v409
    %v513 = vpack.c.b16 %v412, %v411
    %v514 = vpack.c.b16 %v414, %v413
    %v515 = vpack.c.b16 %v416, %v415
    %v516 = vpack.c.b16 %v418, %v417
    %v517 = vpack.c.b16 %v420, %v419
    %v518 = vpack.c.b16 %v422, %v421
    %v519 = vpack.c.b16 %v424, %v423
    %v520 = vpack.c.b16 %v426, %v425
    %v521 = vpack.c.b16 %v428, %v427
    %v522 = vpack.c.b16 %v430, %v429
    %v523 = vpack.c.b16 %v432, %v431
    %v524 = vpack.c.b16 %v434, %v433
    %v525 = vpack.c.b16 %v436, %v435
    %v526 = vpack.c.b16 %v438, %v437
    %v527 = vpack.c.b16 %v440, %v439
    %v528 = vpack.c.b16 %v442, %v441
    %v529 = vpack.c.b16 %v444, %v443
    %v530 = vpack.c.b16 %v446, %v445
    %v531 = vpack.c.b16 %v448, %v447
    %v532 = vpack.c.b16 %v450, %v449
    %v533 = vpack.c.b16 %v452, %v451
    %v534 = vpack.c.b16 %v454, %v453
    %v535 = vpack.c.b16 %v456, %v455
    %v536 = vpack.c.b16 %v458, %v457
    %v537 = vpack.c.b16 %v460, %v459
    %v538 = vpack.c.b16 %v462, %v461
    %v539 = vpack.c.b16 %v464, %v463
    %v540 = vpack.c.b16 %v466, %v465
    %v541 = vpack.c.b16 %v468, %v467
    %v542 = vpack.c.b16 %v470, %v469
    %v543 = vpack.c.b16 %v472, %v471
    %v544 = vpack.c.b16 %v474, %v473
    %v545 = vpack.c.b16 %v476, %v475
    %v546 = vpack.c.b16 %v478, %v477
    %v547 = vpack.c.b16 %v480, %v479
    %v548 = vpack.c.b16 %v482, %v481
    %v549 = vpack.c.b16 %v484, %v483
    %v550 = vpack.c.b16 %v486, %v485
    %615 = vmatprep.subr.bf16.mxu0 0
    %616 = vmatpush1.bf16.msra.mxu0 %v487
    %617 = vmatprep.subr.bf16.mxu0 0
    %618 = vmatpush1.bf16.msra.mxu0 %v488
    %619 = vmatprep.subr.bf16.mxu0 0
    %620 = vmatpush1.bf16.msra.mxu0 %v489
    %621 = vmatprep.subr.bf16.mxu0 0
    %622 = vmatpush1.bf16.msra.mxu0 %v490
    %623 = vmatprep.subr.bf16.mxu0 0
    %624 = vmatpush1.bf16.msra.mxu0 %v491
    %625 = vmatprep.subr.bf16.mxu0 0
    %626 = vmatpush1.bf16.msra.mxu0 %v492
    %627 = vmatprep.subr.bf16.mxu0 0
    %628 = vmatpush1.bf16.msra.mxu0 %v493
    %629 = vmatprep.subr.bf16.mxu0 0
    %630 = vmatpush1.bf16.msra.mxu0 %v494
    %631 = vmatprep.subr.bf16.mxu0 0
    %632 = vmatpush1.bf16.msra.mxu0 %v495
    %633 = vmatprep.subr.bf16.mxu0 0
    %634 = vmatpush1.bf16.msra.mxu0 %v496
    %635 = vmatprep.subr.bf16.mxu0 0
    %636 = vmatpush1.bf16.msra.mxu0 %v497
    %637 = vmatprep.subr.bf16.mxu0 0
    %638 = vmatpush1.bf16.msra.mxu0 %v498
    %639 = vmatprep.subr.bf16.mxu0 0
    %640 = vmatpush1.bf16.msra.mxu0 %v499
    %641 = vmatprep.subr.bf16.mxu0 0
    %642 = vmatpush1.bf16.msra.mxu0 %v500
    %643 = vmatprep.subr.bf16.mxu0 0
    %644 = vmatpush1.bf16.msra.mxu0 %v501
    %645 = vmatprep.subr.bf16.mxu0 0
    %646 = vmatpush1.bf16.msra.mxu0 %v502
    %647 = vmatprep.mubr.bf16.mxu0 %v96
    %648 = vmatmul.mubr.bf16.gmra.mrb[0].mxu0 %v95
    %v649 = vpop.f32.mrb[0].mxu0
    %v650 = vadd.f32 0.0, %v649
    %v651 = vpop.f32.mrb[0].mxu0
    %v652 = vpop.f32.mrb[0].mxu0
    %v653 = vpop.f32.mrb[0].mxu0
    %654 = vdwg.mxu0
    %655 = vmatprep.subr.bf16.mxu0 0
    %656 = vmatpush1.bf16.msra.mxu0 %v503
    %657 = vmatprep.subr.bf16.mxu0 0
    %658 = vmatpush1.bf16.msra.mxu0 %v504
    %659 = vmatprep.subr.bf16.mxu0 0
    %660 = vmatpush1.bf16.msra.mxu0 %v505
    %661 = vmatprep.subr.bf16.mxu0 0
    %662 = vmatpush1.bf16.msra.mxu0 %v506
    %663 = vmatprep.subr.bf16.mxu0 0
    %664 = vmatpush1.bf16.msra.mxu0 %v507
    %665 = vmatprep.subr.bf16.mxu0 0
    %666 = vmatpush1.bf16.msra.mxu0 %v508
    %667 = vmatprep.subr.bf16.mxu0 0
    %668 = vmatpush1.bf16.msra.mxu0 %v509
    %669 = vmatprep.subr.bf16.mxu0 0
    %670 = vmatpush1.bf16.msra.mxu0 %v510
    %671 = vmatprep.subr.bf16.mxu0 0
    %672 = vmatpush1.bf16.msra.mxu0 %v511
    %673 = vmatprep.subr.bf16.mxu0 0
    %674 = vmatpush1.bf16.msra.mxu0 %v512
    %675 = vmatprep.subr.bf16.mxu0 0
    %676 = vmatpush1.bf16.msra.mxu0 %v513
    %677 = vmatprep.subr.bf16.mxu0 0
    %678 = vmatpush1.bf16.msra.mxu0 %v514
    %679 = vmatprep.subr.bf16.mxu0 0
    %680 = vmatpush1.bf16.msra.mxu0 %v515
    %681 = vmatprep.subr.bf16.mxu0 0
    %682 = vmatpush1.bf16.msra.mxu0 %v516
    %683 = vmatprep.subr.bf16.mxu0 0
    %684 = vmatpush1.bf16.msra.mxu0 %v517
    %685 = vmatprep.subr.bf16.mxu0 0
    %686 = vmatpush1.bf16.msra.mxu0 %v518
    %687 = vmatprep.mubr.bf16.mxu0 %v98
    %688 = vmatmul.mubr.bf16.gmra.mrb[0].mxu0 %v97
    %v689 = vpop.f32.mrb[0].mxu0
    %v690 = vadd.f32 %v650, %v689
    %v691 = vpop.f32.mrb[0].mxu0
    %v692 = vpop.f32.mrb[0].mxu0
    %v693 = vpop.f32.mrb[0].mxu0
    %694 = vdwg.mxu0
    %695 = vmatprep.subr.bf16.mxu0 0
    %696 = vmatpush1.bf16.msra.mxu0 %v519
    %697 = vmatprep.subr.bf16.mxu0 0
    %698 = vmatpush1.bf16.msra.mxu0 %v520
    %699 = vmatprep.subr.bf16.mxu0 0
    %700 = vmatpush1.bf16.msra.mxu0 %v521
    %701 = vmatprep.subr.bf16.mxu0 0
    %702 = vmatpush1.bf16.msra.mxu0 %v522
    %703 = vmatprep.subr.bf16.mxu0 0
    %704 = vmatpush1.bf16.msra.mxu0 %v523
    %705 = vmatprep.subr.bf16.mxu0 0
    %706 = vmatpush1.bf16.msra.mxu0 %v524
    %707 = vmatprep.subr.bf16.mxu0 0
    %708 = vmatpush1.bf16.msra.mxu0 %v525
    %709 = vmatprep.subr.bf16.mxu0 0
    %710 = vmatpush1.bf16.msra.mxu0 %v526
    %711 = vmatprep.subr.bf16.mxu0 0
    %712 = vmatpush1.bf16.msra.mxu0 %v527
    %713 = vmatprep.subr.bf16.mxu0 0
    %714 = vmatpush1.bf16.msra.mxu0 %v528
    %715 = vmatprep.subr.bf16.mxu0 0
    %716 = vmatpush1.bf16.msra.mxu0 %v529
    %717 = vmatprep.subr.bf16.mxu0 0
    %718 = vmatpush1.bf16.msra.mxu0 %v530
    %719 = vmatprep.subr.bf16.mxu0 0
    %720 = vmatpush1.bf16.msra.mxu0 %v531
    %721 = vmatprep.subr.bf16.mxu0 0
    %722 = vmatpush1.bf16.msra.mxu0 %v532
    %723 = vmatprep.subr.bf16.mxu0 0
    %724 = vmatpush1.bf16.msra.mxu0 %v533
    %725 = vmatprep.subr.bf16.mxu0 0
    %726 = vmatpush1.bf16.msra.mxu0 %v534
    %727 = vmatprep.mubr.bf16.mxu0 %v100
    %728 = vmatmul.mubr.bf16.gmra.mrb[0].mxu0 %v99
    %v729 = vpop.f32.mrb[0].mxu0
    %v730 = vadd.f32 %v690, %v729
    %v731 = vpop.f32.mrb[0].mxu0
    %v732 = vpop.f32.mrb[0].mxu0
    %v733 = vpop.f32.mrb[0].mxu0
    %734 = vdwg.mxu0
    %735 = vmatprep.subr.bf16.mxu0 0
    %736 = vmatpush1.bf16.msra.mxu0 %v535
    %737 = vmatprep.subr.bf16.mxu0 0
    %738 = vmatpush1.bf16.msra.mxu0 %v536
    %739 = vmatprep.subr.bf16.mxu0 0
    %740 = vmatpush1.bf16.msra.mxu0 %v537
    %741 = vmatprep.subr.bf16.mxu0 0
    %742 = vmatpush1.bf16.msra.mxu0 %v538
    %743 = vmatprep.subr.bf16.mxu0 0
    %744 = vmatpush1.bf16.msra.mxu0 %v539
    %745 = vmatprep.subr.bf16.mxu0 0
    %746 = vmatpush1.bf16.msra.mxu0 %v540
    %747 = vmatprep.subr.bf16.mxu0 0
    %748 = vmatpush1.bf16.msra.mxu0 %v541
    %749 = vmatprep.subr.bf16.mxu0 0
    %750 = vmatpush1.bf16.msra.mxu0 %v542
    %751 = vmatprep.subr.bf16.mxu0 0
    %752 = vmatpush1.bf16.msra.mxu0 %v543
    %753 = vmatprep.subr.bf16.mxu0 0
    %754 = vmatpush1.bf16.msra.mxu0 %v544
    %755 = vmatprep.subr.bf16.mxu0 0
    %756 = vmatpush1.bf16.msra.mxu0 %v545
    %757 = vmatprep.subr.bf16.mxu0 0
    %758 = vmatpush1.bf16.msra.mxu0 %v546
    %759 = vmatprep.subr.bf16.mxu0 0
    %760 = vmatpush1.bf16.msra.mxu0 %v547
    %761 = vmatprep.subr.bf16.mxu0 0
    %762 = vmatpush1.bf16.msra.mxu0 %v548
    %763 = vmatprep.subr.bf16.mxu0 0
    %764 = vmatpush1.bf16.msra.mxu0 %v549
    %765 = vmatprep.subr.bf16.mxu0 0
    %766 = vmatpush1.bf16.msra.mxu0 %v550
    %767 = vmatprep.mubr.bf16.mxu0 %v102
    %768 = vmatmul.mubr.bf16.gmra.mrb[0].mxu0 %v101
    %v769 = vpop.f32.mrb[0].mxu0
    %v770 = vadd.f32 %v730, %v769
    %v771 = vpop.f32.mrb[0].mxu0
    %v772 = vpop.f32.mrb[0].mxu0
    %v773 = vpop.f32.mrb[0].mxu0
    %774 = vdwg.mxu0
    %v775 = vadd.f32 %v86, %v770
    %776 = vst [vmem:[#allocation2] sm:$0xff] %v775
    // Predicated region
    $region50: #{tpu_custom_call.1} parent=1 // pred_check
      %p777 = pneg %p81
    $region51: #{tpu_custom_call.1} parent=1 // pred_check_branch
      %779 = sbr.rel (%p777) target = $region53
    $region52: #{tpu_custom_call.1} parent=1 // pred_region
      %v780 = vld [vmem:[#allocation2] sm:$0xff]
      %v781 = vld [vmem:[%s2] sm:$0x1]
      %v783 = vlaneseq
      %v784 = vshrl.u32 %v783, 7
      %v785 = vsub.s32 0, %v784
      %v786 = vrot.slane %v781, %v785
      %v788 = vadd.f32 %v780, %v786
      %v789 = vmax.f32 %v788, 0.0
      %v790 = vpack.c.bf16 %v789, %v789
      %v791 = vld [vmem:[#allocation8] sm:$0xf]
      %v792 = vld [vmem:[#allocation8 + $0x4] sm:$0xf]
      %v793 = vld [vmem:[#allocation8 + $0x8] sm:$0xf]
      %v794 = vld [vmem:[#allocation8 + $0xc] sm:$0xf]
      %v795 = vld [vmem:[#allocation8 + $0x10] sm:$0xf]
      %v796 = vld [vmem:[#allocation8 + $0x14] sm:$0xf]
      %v797 = vld [vmem:[#allocation8 + $0x18] sm:$0xf]
      %v798 = vld [vmem:[#allocation8 + $0x1c] sm:$0xf]
      %v799 = vld [vmem:[#allocation8 + $0x20] sm:$0xf]
      %v800 = vld [vmem:[#allocation8 + $0x24] sm:$0xf]
      %v801 = vld [vmem:[#allocation8 + $0x28] sm:$0xf]
      %v802 = vld [vmem:[#allocation8 + $0x2c] sm:$0xf]
      %v803 = vld [vmem:[#allocation8 + $0x30] sm:$0xf]
      %v804 = vld [vmem:[#allocation8 + $0x34] sm:$0xf]
      %v805 = vld [vmem:[#allocation8 + $0x38] sm:$0xf]
      %v806 = vld [vmem:[#allocation8 + $0x3c] sm:$0xf]
      %v807 = vld [vmem:[%s4] sm:$0x1]
      %v809 = vlaneseq
      %v810 = vshrl.u32 %v809, 7
      %v811 = vsub.s32 0, %v810
      %v812 = vrot.slane %v807, %v811
      %v830 = vunpack.c.l.b16 %v791
      %v831 = vunpack.c.l.b16 %v792
      %v832 = vunpack.c.l.b16 %v793
      %v833 = vunpack.c.l.b16 %v794
      %v834 = vunpack.c.l.b16 %v795
      %v835 = vunpack.c.l.b16 %v796
      %v836 = vunpack.c.l.b16 %v797
      %v837 = vunpack.c.l.b16 %v798
      %v838 = vunpack.c.l.b16 %v799
      %v839 = vunpack.c.l.b16 %v800
      %v840 = vunpack.c.l.b16 %v801
      %v841 = vunpack.c.l.b16 %v802
      %v842 = vunpack.c.l.b16 %v803
      %v843 = vunpack.c.l.b16 %v804
      %v844 = vunpack.c.l.b16 %v805
      %v845 = vunpack.c.l.b16 %v806
      %v846 = vpack.c.b16 %v831, %v830
      %v847 = vpack.c.b16 %v833, %v832
      %v848 = vpack.c.b16 %v835, %v834
      %v849 = vpack.c.b16 %v837, %v836
      %v850 = vpack.c.b16 %v839, %v838
      %v851 = vpack.c.b16 %v841, %v840
      %v852 = vpack.c.b16 %v843, %v842
      %v853 = vpack.c.b16 %v845, %v844
      %862 = vmatprep.subr.bf16.mxu0 0
      %863 = vmatpush1.bf16.msra.mxu0 %v846
      %864 = vmatprep.subr.bf16.mxu0 0
      %865 = vmatpush1.bf16.msra.mxu0 %v847
      %866 = vmatprep.subr.bf16.mxu0 0
      %867 = vmatpush1.bf16.msra.mxu0 %v848
      %868 = vmatprep.subr.bf16.mxu0 0
      %869 = vmatpush1.bf16.msra.mxu0 %v849
      %870 = vmatprep.subr.bf16.mxu0 0
      %871 = vmatpush1.bf16.msra.mxu0 %v850
      %872 = vmatprep.subr.bf16.mxu0 0
      %873 = vmatpush1.bf16.msra.mxu0 %v851
      %874 = vmatprep.subr.bf16.mxu0 0
      %875 = vmatpush1.bf16.msra.mxu0 %v852
      %876 = vmatprep.subr.bf16.mxu0 0
      %877 = vmatpush1.bf16.msra.mxu0 %v853
      %878 = vmatprep.subr.bf16.mxu0 0
      %879 = vmatpush1.bf16.msra.mxu0 0
      %880 = vmatprep.subr.bf16.mxu0 0
      %881 = vmatpush1.bf16.msra.mxu0 0
      %882 = vmatprep.subr.bf16.mxu0 0
      %883 = vmatpush1.bf16.msra.mxu0 0
      %884 = vmatprep.subr.bf16.mxu0 0
      %885 = vmatpush1.bf16.msra.mxu0 0
      %886 = vmatprep.subr.bf16.mxu0 0
      %887 = vmatpush1.bf16.msra.mxu0 0
      %888 = vmatprep.subr.bf16.mxu0 0
      %889 = vmatpush1.bf16.msra.mxu0 0
      %890 = vmatprep.subr.bf16.mxu0 0
      %891 = vmatpush1.bf16.msra.mxu0 0
      %892 = vmatprep.subr.bf16.mxu0 0
      %893 = vmatpush1.bf16.msra.mxu0 0
      %894 = vmatprep.mubr.bf16.mxu0 0
      %895 = vmatmul.mubr.bf16.gmra.mrb[0].mxu0 %v790
      %v896 = vpop.f32.mrb[0].mxu0
      %v897 = vadd.f32 %v812, %v896
      %v898 = vpop.f32.mrb[0].mxu0
      %v899 = vpop.f32.mrb[0].mxu0
      %v900 = vpop.f32.mrb[0].mxu0
      %901 = vdwg.mxu0
      %v902 = vmax.f32 %v897, 0.0
      %v903 = vpack.c.bf16 %v902, %v902
      %v904 = vld [vmem:[#allocation9] sm:$0xf]
      %v905 = vld [vmem:[#allocation9 + $0x4] sm:$0xf]
      %v906 = vld [vmem:[#allocation9 + $0x8] sm:$0xf]
      %v907 = vld [vmem:[#allocation9 + $0xc] sm:$0xf]
      %v908 = vld [vmem:[#allocation9 + $0x10] sm:$0xf]
      %v909 = vld [vmem:[#allocation9 + $0x14] sm:$0xf]
      %v910 = vld [vmem:[#allocation9 + $0x18] sm:$0xf]
      %v911 = vld [vmem:[#allocation9 + $0x1c] sm:$0xf]
      %v912 = vld [vmem:[#allocation9 + $0x20] sm:$0xf]
      %v913 = vld [vmem:[#allocation9 + $0x24] sm:$0xf]
      %v914 = vld [vmem:[#allocation9 + $0x28] sm:$0xf]
      %v915 = vld [vmem:[#allocation9 + $0x2c] sm:$0xf]
      %v916 = vld [vmem:[#allocation9 + $0x30] sm:$0xf]
      %v917 = vld [vmem:[#allocation9 + $0x34] sm:$0xf]
      %v918 = vld [vmem:[#allocation9 + $0x38] sm:$0xf]
      %v919 = vld [vmem:[#allocation9 + $0x3c] sm:$0xf]
      %v920 = vld [vmem:[%s6] sm:$0x1]
      %v922 = vlaneseq
      %v923 = vshrl.u32 %v922, 7
      %v924 = vsub.s32 0, %v923
      %v925 = vrot.slane %v920, %v924
      %v943 = vunpack.c.l.b16 %v904
      %v944 = vunpack.c.l.b16 %v905
      %v945 = vunpack.c.l.b16 %v906
      %v946 = vunpack.c.l.b16 %v907
      %v947 = vunpack.c.l.b16 %v908
      %v948 = vunpack.c.l.b16 %v909
      %v949 = vunpack.c.l.b16 %v910
      %v950 = vunpack.c.l.b16 %v911
      %v951 = vunpack.c.l.b16 %v912
      %v952 = vunpack.c.l.b16 %v913
      %v953 = vunpack.c.l.b16 %v914
      %v954 = vunpack.c.l.b16 %v915
      %v955 = vunpack.c.l.b16 %v916
      %v956 = vunpack.c.l.b16 %v917
      %v957 = vunpack.c.l.b16 %v918
      %v958 = vunpack.c.l.b16 %v919
      %v959 = vpack.c.b16 %v944, %v943
      %v960 = vpack.c.b16 %v946, %v945
      %v961 = vpack.c.b16 %v948, %v947
      %v962 = vpack.c.b16 %v950, %v949
      %v963 = vpack.c.b16 %v952, %v951
      %v964 = vpack.c.b16 %v954, %v953
      %v965 = vpack.c.b16 %v956, %v955
      %v966 = vpack.c.b16 %v958, %v957
      %975 = vmatprep.subr.bf16.mxu0 0
      %976 = vmatpush1.bf16.msra.mxu0 %v959
      %977 = vmatprep.subr.bf16.mxu0 0
      %978 = vmatpush1.bf16.msra.mxu0 %v960
      %979 = vmatprep.subr.bf16.mxu0 0
      %980 = vmatpush1.bf16.msra.mxu0 %v961
      %981 = vmatprep.subr.bf16.mxu0 0
      %982 = vmatpush1.bf16.msra.mxu0 %v962
      %983 = vmatprep.subr.bf16.mxu0 0
      %984 = vmatpush1.bf16.msra.mxu0 %v963
      %985 = vmatprep.subr.bf16.mxu0 0
      %986 = vmatpush1.bf16.msra.mxu0 %v964
      %987 = vmatprep.subr.bf16.mxu0 0
      %988 = vmatpush1.bf16.msra.mxu0 %v965
      %989 = vmatprep.subr.bf16.mxu0 0
      %990 = vmatpush1.bf16.msra.mxu0 %v966
      %991 = vmatprep.subr.bf16.mxu0 0
      %992 = vmatpush1.bf16.msra.mxu0 0
      %993 = vmatprep.subr.bf16.mxu0 0
      %994 = vmatpush1.bf16.msra.mxu0 0
      %995 = vmatprep.subr.bf16.mxu0 0
      %996 = vmatpush1.bf16.msra.mxu0 0
      %997 = vmatprep.subr.bf16.mxu0 0
      %998 = vmatpush1.bf16.msra.mxu0 0
      %999 = vmatprep.subr.bf16.mxu0 0
      %1000 = vmatpush1.bf16.msra.mxu0 0
      %1001 = vmatprep.subr.bf16.mxu0 0
      %1002 = vmatpush1.bf16.msra.mxu0 0
      %1003 = vmatprep.subr.bf16.mxu0 0
      %1004 = vmatpush1.bf16.msra.mxu0 0
      %1005 = vmatprep.subr.bf16.mxu0 0
      %1006 = vmatpush1.bf16.msra.mxu0 0
      %1007 = vmatprep.mubr.bf16.mxu0 0
      %1008 = vmatmul.mubr.bf16.gmra.mrb[0].mxu0 %v903
      %v1009 = vpop.f32.mrb[0].mxu0
      %v1010 = vadd.f32 %v925, %v1009
      %v1011 = vpop.f32.mrb[0].mxu0
      %v1012 = vpop.f32.mrb[0].mxu0
      %v1013 = vpop.f32.mrb[0].mxu0
      %1014 = vdwg.mxu0
      %1015 = vst [vmem:[#allocation11] sm:$0xff] %v1010
    $region53: #{tpu_custom_call.1} parent=1 // pred_fallthru
      _
    // Predicated region
    $region54: #{tpu_custom_call.1} parent=1 // pred_check
      _
    $region55: #{tpu_custom_call.1} parent=1 // pred_check_branch
      %1017 = sbr.rel (0) target = $region57
    $region56: #{tpu_custom_call.1} parent=1 // pred_region
      %s1019 = ssub.s32 128, 128
      %1020 = vsyncadd [#allocation5], %s1019
      %s1022 = sshll.u32 [#allocation11], 4
      %s1023 = int_to_ptr.vmem [resolvable:$true] %s1022
      %1025 = dma.vmem_to_hbm [thread:$0]  %s1023, 128, %s7, [#allocation5]
    $region57: #{tpu_custom_call.1} parent=1 // pred_fallthru
      _
    // Predicated region
    $region58: #{tpu_custom_call.1} parent=1 // pred_check
      _
    $region59: #{tpu_custom_call.1} parent=1 // pred_check_branch
      %1027 = sbr.rel (0) target = $region61
    $region60: #{tpu_custom_call.1} parent=1 // pred_region
      %1028 = dma.done [#allocation5], 128
    $region61: #{tpu_custom_call.1} parent=1 // pred_fallthru
      _
    %1029 = vsyncpa [#allocation4], 1
    %1030 = vsyncpa [#allocation7], 1
    %1031 = vsyncpa [#allocation10], 1
    %1032 = vsyncpa [#allocation5], 1

</llo_original>
